<compile_context>
chip_gen: v7x
topology: tpu7x:2x2x1
jax: 0.10.0
libtpu: 0.0.40
codegen_flags: <defaults>
</compile_context>

<pallas_src>
import functools
import math

import jax
import jax.numpy as jnp
from jax.experimental import pallas as pl
from jax.experimental.pallas import tpu as pltpu  # noqa: F401  (TPU backend)

EPS = 1e-5
LANE = 128

# Row layout of the packed (8, P) per-feature parameter buffer.
_ROW_B1, _ROW_G1, _ROW_BE1, _ROW_B2, _ROW_G2, _ROW_BE2, _ROW_B3 = range(7)


def _round_up(x, m):
    return ((x + m - 1) // m) * m


def _qnet_kernel(x_ref, w1_ref, w2_ref, w3_ref, p_ref, o_ref, *, h1_dim, h2_dim):
    x = x_ref[...]

    # One load of the packed per-feature parameter tile (single (8, P) slab),
    # then static in-register slices.  Hoisted once -- no per-layer re-loads.
    pp = p_ref[...]
    b1 = pp[_ROW_B1:_ROW_B1 + 1, :h1_dim]
    g1 = pp[_ROW_G1:_ROW_G1 + 1, :h1_dim]
    be1 = pp[_ROW_BE1:_ROW_BE1 + 1, :h1_dim]
    b2 = pp[_ROW_B2:_ROW_B2 + 1, :h2_dim]
    g2 = pp[_ROW_G2:_ROW_G2 + 1, :h2_dim]
    be2 = pp[_ROW_BE2:_ROW_BE2 + 1, :h2_dim]
    b3 = pp[_ROW_B3:_ROW_B3 + 1, :]          # full padded lane width (lane-dense fc3)

    # ---- fc1 + ReLU -----------------------------------------------------
    h1 = jnp.dot(x, w1_ref[...], preferred_element_type=jnp.float32) + b1
    h1 = jnp.maximum(h1, 0.0)

    # ---- bn1: single-pass batch stats, fused scale/shift -----------------
    m1 = jnp.mean(h1, axis=0, keepdims=True)
    v1 = jnp.mean(h1 * h1, axis=0, keepdims=True) - m1 * m1   # biased variance
    s1 = g1 * jax.lax.rsqrt(v1 + EPS)
    t1 = be1 - m1 * s1
    h1 = h1 * s1 + t1

    # ---- fc2 + ReLU -------------------------------------------------------
    h2 = jnp.dot(h1, w2_ref[...], preferred_element_type=jnp.float32) + b2
    h2 = jnp.maximum(h2, 0.0)

    # ---- bn2: single-pass batch stats, fused scale/shift ------------------
    m2 = jnp.mean(h2, axis=0, keepdims=True)
    v2 = jnp.mean(h2 * h2, axis=0, keepdims=True) - m2 * m2
    s2 = g2 * jax.lax.rsqrt(v2 + EPS)
    t2 = be2 - m2 * s2
    h2 = h2 * s2 + t2

    # ---- fc3 (output lane-padded to a multiple of 128 -> unmasked stores) --
    out = jnp.dot(h2, w3_ref[...], preferred_element_type=jnp.float32) + b3
    o_ref[...] = out.astype(o_ref.dtype)


def pack_params(params):
    """One-time packing (do this outside the hot path):
       - pad fc3 (w3, b3) out to a multiple of 128 output features,
       - pack the 8 small per-feature vectors into a single (8, P) buffer."""
    (w1, b1, g1, be1, w2, b2, g2, be2, w3, b3) = params
    H1, H2, A = w1.shape[1], w2.shape[1], w3.shape[1]
    P = _round_up(max(H1, H2, A, LANE), LANE)

    w3p = jnp.zeros((H2, P), jnp.float32).at[:, :A].set(w3)

    small = jnp.zeros((8, P), jnp.float32)
    small = small.at[_ROW_B1, :H1].set(b1.reshape(-1))
    small = small.at[_ROW_G1, :H1].set(g1.reshape(-1))
    small = small.at[_ROW_BE1, :H1].set(be1.reshape(-1))
    small = small.at[_ROW_B2, :H2].set(b2.reshape(-1))
    small = small.at[_ROW_G2, :H2].set(g2.reshape(-1))
    small = small.at[_ROW_BE2, :H2].set(be2.reshape(-1))
    small = small.at[_ROW_B3, :A].set(b3.reshape(-1))

    return (w1, w2, w3p, small)


def qnetwork_forward(state, packed_params, action_size):
    """state: [B, state_size] f32 -> [B, action_size] f32."""
    w1, w2, w3p, small = packed_params
    B = state.shape[0]
    H1, H2 = w1.shape[1], w2.shape[1]
    P = w3p.shape[1]

    kernel = functools.partial(_qnet_kernel, h1_dim=H1, h2_dim=H2)
    full = lambda arr: pl.BlockSpec(arr.shape, lambda: tuple(0 for _ in arr.shape))

    out_padded = pl.pallas_call(
        kernel,
        out_shape=jax.ShapeDtypeStruct((B, P), jnp.float32),
        grid=(),
        in_specs=[full(state), full(w1), full(w2), full(w3p), full(small)],
        out_specs=pl.BlockSpec((B, P), lambda: (0, 0)),
    )(state, w1, w2, w3p, small)

    return out_padded[:, :action_size]


def init_params(key, state_size, action_size, fc1_units=64, fc2_units=64):
    """Deterministic init mimicking torch.nn.Linear defaults
    (U[-1/sqrt(fan_in), 1/sqrt(fan_in)]) and BatchNorm1d defaults (gamma=1, beta=0)."""
    ks = jax.random.split(key, 6)

    def linear(kw, kb, fan_in, fan_out):
        bound = 1.0 / math.sqrt(fan_in)
        w = jax.random.uniform(kw, (fan_in, fan_out), jnp.float32, -bound, bound)
        b = jax.random.uniform(kb, (1, fan_out), jnp.float32, -bound, bound)
        return w, b

    w1, b1 = linear(ks[0], ks[1], state_size, fc1_units)
    w2, b2 = linear(ks[2], ks[3], fc1_units, fc2_units)
    w3, b3 = linear(ks[4], ks[5], fc2_units, action_size)

    g1 = jnp.ones((1, fc1_units), jnp.float32)
    be1 = jnp.zeros((1, fc1_units), jnp.float32)
    g2 = jnp.ones((1, fc2_units), jnp.float32)
    be2 = jnp.zeros((1, fc2_units), jnp.float32)

    return (w1, b1, g1, be1, w2, b2, g2, be2, w3, b3)


def reference_forward(state, params):
    """Pure-JAX reference with exact (two-pass) training-mode BN semantics."""
    (w1, b1, g1, be1, w2, b2, g2, be2, w3, b3) = params

    def bn(x, g, b):
        m = jnp.mean(x, axis=0, keepdims=True)
        v = jnp.mean((x - m) ** 2, axis=0, keepdims=True)
        return g * (x - m) / jnp.sqrt(v + EPS) + b

    h = jnp.maximum(state @ w1 + b1, 0.0)
    h = bn(h, g1, be1)
    h = jnp.maximum(h @ w2 + b2, 0.0)
    h = bn(h, g2, be2)
    return h @ w3 + b3


if __name__ == "__main__":
    key = jax.random.PRNGKey(0)
    k_param, k_state = jax.random.split(key)

    batch = 8          # kernel also supports large replay-buffer batches (256-8192)
    state_size = 16
    action_size = 4

    params = init_params(k_param, state_size, action_size, fc1_units=64, fc2_units=64)
    packed = pack_params(params)  # one-time packing, off the hot path
    state = jax.random.normal(k_state, (batch, state_size), jnp.float32)

    out = qnetwork_forward(state, packed, action_size)
    out = jax.block_until_ready(out)

    ref = reference_forward(state, params)
    assert out.shape == (batch, action_size)
    # Slightly relaxed tolerance: in-kernel BN uses single-pass variance
    # (mean(h*h) - m*m) and a fused scale/shift; validated against the exact
    # two-pass reference.
    assert jnp.allclose(out, ref, atol=2e-4, rtol=2e-4), float(jnp.max(jnp.abs(out - ref)))

    print("KERNEL_OK")
</pallas_src>

<mosaic_0001>
module attributes {stable_mosaic.version = 11 : i64} {
  func.func @_qnet_kernel(%arg0: memref<8x16xf32, #tpu.memory_space<vmem>>, %arg1: memref<16x64xf32, #tpu.memory_space<vmem>>, %arg2: memref<64x64xf32, #tpu.memory_space<vmem>>, %arg3: memref<64x128xf32, #tpu.memory_space<vmem>>, %arg4: memref<8x128xf32, #tpu.memory_space<vmem>>, %arg5: memref<8x128xf32, #tpu.memory_space<vmem>>) attributes {dimension_semantics = [], scalar_prefetch = 0 : i64, scratch_operands = 0 : i64, tpu.core_type = #tpu.core_type<tc>} {
    %c0 = arith.constant 0 : index
    %c0_0 = arith.constant 0 : index
    %0 = vector.load %arg0[%c0, %c0_0] : memref<8x16xf32, #tpu.memory_space<vmem>>, vector<8x16xf32>
    %c0_1 = arith.constant 0 : index
    %c0_2 = arith.constant 0 : index
    %1 = vector.load %arg4[%c0_1, %c0_2] : memref<8x128xf32, #tpu.memory_space<vmem>>, vector<8x128xf32>
    %2 = vector.extract_strided_slice %1 {offsets = [0, 0], sizes = [1, 64], strides = [1, 1]} : vector<8x128xf32> to vector<1x64xf32>
    %3 = vector.extract_strided_slice %1 {offsets = [1, 0], sizes = [1, 64], strides = [1, 1]} : vector<8x128xf32> to vector<1x64xf32>
    %4 = vector.extract_strided_slice %1 {offsets = [2, 0], sizes = [1, 64], strides = [1, 1]} : vector<8x128xf32> to vector<1x64xf32>
    %5 = vector.extract_strided_slice %1 {offsets = [3, 0], sizes = [1, 64], strides = [1, 1]} : vector<8x128xf32> to vector<1x64xf32>
    %6 = vector.extract_strided_slice %1 {offsets = [4, 0], sizes = [1, 64], strides = [1, 1]} : vector<8x128xf32> to vector<1x64xf32>
    %7 = vector.extract_strided_slice %1 {offsets = [5, 0], sizes = [1, 64], strides = [1, 1]} : vector<8x128xf32> to vector<1x64xf32>
    %8 = vector.extract_strided_slice %1 {offsets = [6, 0], sizes = [1, 128], strides = [1, 1]} : vector<8x128xf32> to vector<1x128xf32>
    %c0_3 = arith.constant 0 : index
    %c0_4 = arith.constant 0 : index
    %9 = vector.load %arg1[%c0_3, %c0_4] : memref<16x64xf32, #tpu.memory_space<vmem>>, vector<16x64xf32>
    %cst = arith.constant dense<0.000000e+00> : vector<8x64xf32>
    %10 = tpu.matmul %0, %9, %cst {dimension_numbers = #tpu.dot_dimension_numbers<[1], [0], [0], [1], [0, 0, 1, 1], [], []>} : vector<8x16xf32>, vector<16x64xf32>, vector<8x64xf32> -> vector<8x64xf32>
    %11 = vector.broadcast %2 : vector<1x64xf32> to vector<8x64xf32>
    %12 = arith.addf %10, %11 : vector<8x64xf32>
    %cst_5 = arith.constant 0.000000e+00 : f32
    %13 = vector.broadcast %cst_5 : f32 to vector<8x64xf32>
    %14 = arith.maximumf %12, %13 : vector<8x64xf32>
    %cst_6 = arith.constant dense<0.000000e+00> : vector<64xf32>
    %15 = vector.multi_reduction <add>, %14, %cst_6 [0] : vector<8x64xf32> to vector<64xf32>
    %16 = vector.shape_cast %15 : vector<64xf32> to vector<1x64xf32>
    %cst_7 = arith.constant 8.000000e+00 : f32
    %17 = vector.broadcast %cst_7 : f32 to vector<1x64xf32>
    %18 = arith.divf %16, %17 : vector<1x64xf32>
    %19 = arith.mulf %14, %14 : vector<8x64xf32>
    %cst_8 = arith.constant dense<0.000000e+00> : vector<64xf32>
    %20 = vector.multi_reduction <add>, %19, %cst_8 [0] : vector<8x64xf32> to vector<64xf32>
    %21 = vector.shape_cast %20 : vector<64xf32> to vector<1x64xf32>
    %cst_9 = arith.constant 8.000000e+00 : f32
    %22 = vector.broadcast %cst_9 : f32 to vector<1x64xf32>
    %23 = arith.divf %21, %22 : vector<1x64xf32>
    %24 = arith.mulf %18, %18 : vector<1x64xf32>
    %25 = arith.subf %23, %24 : vector<1x64xf32>
    %cst_10 = arith.constant 9.99999974E-6 : f32
    %26 = vector.broadcast %cst_10 : f32 to vector<1x64xf32>
    %27 = arith.addf %25, %26 : vector<1x64xf32>
    %28 = math.rsqrt %27 : vector<1x64xf32>
    %29 = arith.mulf %3, %28 : vector<1x64xf32>
    %30 = arith.mulf %18, %29 : vector<1x64xf32>
    %31 = arith.subf %4, %30 : vector<1x64xf32>
    %32 = vector.broadcast %29 : vector<1x64xf32> to vector<8x64xf32>
    %33 = arith.mulf %14, %32 : vector<8x64xf32>
    %34 = vector.broadcast %31 : vector<1x64xf32> to vector<8x64xf32>
    %35 = arith.addf %33, %34 : vector<8x64xf32>
    %c0_11 = arith.constant 0 : index
    %c0_12 = arith.constant 0 : index
    %36 = vector.load %arg2[%c0_11, %c0_12] : memref<64x64xf32, #tpu.memory_space<vmem>>, vector<64x64xf32>
    %cst_13 = arith.constant dense<0.000000e+00> : vector<8x64xf32>
    %37 = tpu.matmul %35, %36, %cst_13 {dimension_numbers = #tpu.dot_dimension_numbers<[1], [0], [0], [1], [0, 0, 1, 1], [], []>} : vector<8x64xf32>, vector<64x64xf32>, vector<8x64xf32> -> vector<8x64xf32>
    %38 = vector.broadcast %5 : vector<1x64xf32> to vector<8x64xf32>
    %39 = arith.addf %37, %38 : vector<8x64xf32>
    %cst_14 = arith.constant 0.000000e+00 : f32
    %40 = vector.broadcast %cst_14 : f32 to vector<8x64xf32>
    %41 = arith.maximumf %39, %40 : vector<8x64xf32>
    %cst_15 = arith.constant dense<0.000000e+00> : vector<64xf32>
    %42 = vector.multi_reduction <add>, %41, %cst_15 [0] : vector<8x64xf32> to vector<64xf32>
    %43 = vector.shape_cast %42 : vector<64xf32> to vector<1x64xf32>
    %cst_16 = arith.constant 8.000000e+00 : f32
    %44 = vector.broadcast %cst_16 : f32 to vector<1x64xf32>
    %45 = arith.divf %43, %44 : vector<1x64xf32>
    %46 = arith.mulf %41, %41 : vector<8x64xf32>
    %cst_17 = arith.constant dense<0.000000e+00> : vector<64xf32>
    %47 = vector.multi_reduction <add>, %46, %cst_17 [0] : vector<8x64xf32> to vector<64xf32>
    %48 = vector.shape_cast %47 : vector<64xf32> to vector<1x64xf32>
    %cst_18 = arith.constant 8.000000e+00 : f32
    %49 = vector.broadcast %cst_18 : f32 to vector<1x64xf32>
    %50 = arith.divf %48, %49 : vector<1x64xf32>
    %51 = arith.mulf %45, %45 : vector<1x64xf32>
    %52 = arith.subf %50, %51 : vector<1x64xf32>
    %cst_19 = arith.constant 9.99999974E-6 : f32
    %53 = vector.broadcast %cst_19 : f32 to vector<1x64xf32>
    %54 = arith.addf %52, %53 : vector<1x64xf32>
    %55 = math.rsqrt %54 : vector<1x64xf32>
    %56 = arith.mulf %6, %55 : vector<1x64xf32>
    %57 = arith.mulf %45, %56 : vector<1x64xf32>
    %58 = arith.subf %7, %57 : vector<1x64xf32>
    %59 = vector.broadcast %56 : vector<1x64xf32> to vector<8x64xf32>
    %60 = arith.mulf %41, %59 : vector<8x64xf32>
    %61 = vector.broadcast %58 : vector<1x64xf32> to vector<8x64xf32>
    %62 = arith.addf %60, %61 : vector<8x64xf32>
    %c0_20 = arith.constant 0 : index
    %c0_21 = arith.constant 0 : index
    %63 = vector.load %arg3[%c0_20, %c0_21] : memref<64x128xf32, #tpu.memory_space<vmem>>, vector<64x128xf32>
    %cst_22 = arith.constant dense<0.000000e+00> : vector<8x128xf32>
    %64 = tpu.matmul %62, %63, %cst_22 {dimension_numbers = #tpu.dot_dimension_numbers<[1], [0], [0], [1], [0, 0, 1, 1], [], []>} : vector<8x64xf32>, vector<64x128xf32>, vector<8x128xf32> -> vector<8x128xf32>
    %65 = vector.broadcast %8 : vector<1x128xf32> to vector<8x128xf32>
    %66 = arith.addf %64, %65 : vector<8x128xf32>
    %c0_23 = arith.constant 0 : index
    %c0_24 = arith.constant 0 : index
    %67 = vector.load %arg5[%c0_23, %c0_24] : memref<8x128xf32, #tpu.memory_space<vmem>>, vector<8x128xf32>
    tpu.vector_store %arg5[%c0_23, %c0_24], %66 {strides = array<i32>} : memref<8x128xf32, #tpu.memory_space<vmem>>, vector<8x128xf32>,
    return
  }
}

</mosaic_0001>

<llo_original>
// kernel: tpu_custom_call.1
$region0: #{tpu_custom_call.1}
  #allocation0 [shape = 'u32[]', space=smem, size = 0x4, offset = 0x4, fixed_abs, tag = 'smem constant byte address 0x4 - core index']
  #allocation1 [shape = 'u32[144,128]{1,0:T(1,128)}', space=vmem, size = 0x12000, scoped, tag = 'internal scratch']
  %s0 = inlined_call_operand.hbm [shape: f32[8,16], index: 0, kind: input, shape index: {}]
  %s1 = inlined_call_operand.hbm [shape: f32[16,64], index: 1, kind: input, shape index: {}]
  %s2 = inlined_call_operand.hbm [shape: f32[64,64], index: 2, kind: input, shape index: {}]
  %s3 = inlined_call_operand.hbm [shape: f32[64,128], index: 3, kind: input, shape index: {}]
  %s4 = inlined_call_operand.vmem [shape: f32[8,128], index: 4, kind: input, shape index: {}]
  %s5 = inlined_call_operand.hbm [shape: f32[8,128], index: 5, kind: output, shape index: {}]
  %s6 = sld [smem:[#allocation0]]
  $region46: #{tpu_custom_call.1} parent=0
    _
  %s8 = ssub.s32 1, %s6
  %s9 = scalar_select 0, %s8, %s6
  $region1: #{tpu_custom_call.1} parent=0
    #allocation2 [shape = 'u8[4096]{0}', space=vmem, size = 0x1000, scoped, tag = 'input window, operand 0, single buffered']
    #allocation3 [shape = 's32[1]{0}', space=sflag, size = 0x4, scoped, tag = 'scoped memory for tpu_custom_call.1']
    #allocation4 [shape = 's32[1]{0}', space=sflag, size = 0x4, scoped, tag = 'scoped memory for tpu_custom_call.1']
    #allocation5 [shape = 'u8[8192]{0}', space=vmem, size = 0x2000, scoped, tag = 'input window, operand 1, single buffered']
    #allocation6 [shape = 's32[1]{0}', space=sflag, size = 0x4, scoped, tag = 'scoped memory for tpu_custom_call.1']
    #allocation7 [shape = 'u8[32768]{0}', space=vmem, size = 0x8000, scoped, tag = 'input window, operand 2, single buffered']
    #allocation8 [shape = 'u8[32768]{0}', space=vmem, size = 0x8000, scoped, tag = 'input window, operand 3, single buffered']
    #allocation9 [shape = 's32[1]{0}', space=sflag, size = 0x4, scoped, tag = 'scoped memory for tpu_custom_call.1']
    #allocation10 [shape = 'u8[4096]{0}', space=vmem, size = 0x1000, scoped, tag = 'output window, operand 0, single buffered']
    %10 = vsyncpa [#allocation3], 0
    %11 = vsyncpa [#allocation6], 0
    %12 = vsyncpa [#allocation9], 0
    %13 = vsyncpa [#allocation4], 0
    // Predicated region
    $region2: #{tpu_custom_call.1} parent=1 // pred_check
      _
    $region3: #{tpu_custom_call.1} parent=1 // pred_check_branch
      %15 = sbr.rel (0) target = $region5
    $region4: #{tpu_custom_call.1} parent=1 // pred_region
      %s17 = ssub.s32 128, 128
      %18 = vsyncadd [#allocation3], %s17
      %s20 = sshll.u32 [#allocation2], 4
      %s21 = int_to_ptr.vmem [resolvable:$true] %s20
      %23 = dma.hbm_to_vmem [thread:$0]  %s0, 128, %s21, [#allocation3]
    $region5: #{tpu_custom_call.1} parent=1 // pred_fallthru
      _
    // Predicated region
    $region6: #{tpu_custom_call.1} parent=1 // pred_check
      _
    $region7: #{tpu_custom_call.1} parent=1 // pred_check_branch
      %25 = sbr.rel (0) target = $region9
    $region8: #{tpu_custom_call.1} parent=1 // pred_region
      %s27 = ssub.s32 256, 256
      %28 = vsyncadd [#allocation6], %s27
      %s29 = sshll.u32 [#allocation5], 4
      %s30 = int_to_ptr.vmem [resolvable:$true] %s29
      %35 = dma.hbm_to_vmem [thread:$0]  %s1, 256, %s30, [#allocation6], 128, 128, 8
    $region9: #{tpu_custom_call.1} parent=1 // pred_fallthru
      _
    // Predicated region
    $region10: #{tpu_custom_call.1} parent=1 // pred_check
      _
    $region11: #{tpu_custom_call.1} parent=1 // pred_check_branch
      %37 = sbr.rel (0) target = $region13
    $region12: #{tpu_custom_call.1} parent=1 // pred_region
      %s39 = ssub.s32 1024, 1024
      %40 = vsyncadd [#allocation6], %s39
      %s41 = sshll.u32 [#allocation7], 4
      %s42 = int_to_ptr.vmem [resolvable:$true] %s41
      %47 = dma.hbm_to_vmem [thread:$0]  %s2, 1024, %s42, [#allocation6], 128, 128, 8
    $region13: #{tpu_custom_call.1} parent=1 // pred_fallthru
      _
    // Predicated region
    $region14: #{tpu_custom_call.1} parent=1 // pred_check
      _
    $region15: #{tpu_custom_call.1} parent=1 // pred_check_branch
      %49 = sbr.rel (0) target = $region17
    $region16: #{tpu_custom_call.1} parent=1 // pred_region
      %s51 = ssub.s32 1024, 1024
      %52 = vsyncadd [#allocation9], %s51
      %s53 = sshll.u32 [#allocation8], 4
      %s54 = int_to_ptr.vmem [resolvable:$true] %s53
      %59 = dma.hbm_to_vmem [thread:$0]  %s3, 1024, %s54, [#allocation9], 128, 128, 8
    $region17: #{tpu_custom_call.1} parent=1 // pred_fallthru
      _
    // Predicated region
    $region18: #{tpu_custom_call.1} parent=1 // pred_check
      _
    $region19: #{tpu_custom_call.1} parent=1 // pred_check_branch
      %61 = sbr.rel (0) target = $region21
    $region20: #{tpu_custom_call.1} parent=1 // pred_region
      _
    $region21: #{tpu_custom_call.1} parent=1 // pred_fallthru
      _
    // Predicated region
    $region22: #{tpu_custom_call.1} parent=1 // pred_check
      _
    $region23: #{tpu_custom_call.1} parent=1 // pred_check_branch
      %63 = sbr.rel (0) target = $region25
    $region24: #{tpu_custom_call.1} parent=1 // pred_region
      %64 = dma.done [#allocation3], 128
    $region25: #{tpu_custom_call.1} parent=1 // pred_fallthru
      _
    // Predicated region
    $region26: #{tpu_custom_call.1} parent=1 // pred_check
      _
    $region27: #{tpu_custom_call.1} parent=1 // pred_check_branch
      %66 = sbr.rel (0) target = $region29
    $region28: #{tpu_custom_call.1} parent=1 // pred_region
      %67 = dma.done [#allocation6], 256
    $region29: #{tpu_custom_call.1} parent=1 // pred_fallthru
      _
    // Predicated region
    $region30: #{tpu_custom_call.1} parent=1 // pred_check
      _
    $region31: #{tpu_custom_call.1} parent=1 // pred_check_branch
      %69 = sbr.rel (0) target = $region33
    $region32: #{tpu_custom_call.1} parent=1 // pred_region
      %70 = dma.done [#allocation6], 1024
    $region33: #{tpu_custom_call.1} parent=1 // pred_fallthru
      _
    // Predicated region
    $region34: #{tpu_custom_call.1} parent=1 // pred_check
      _
    $region35: #{tpu_custom_call.1} parent=1 // pred_check_branch
      %72 = sbr.rel (0) target = $region37
    $region36: #{tpu_custom_call.1} parent=1 // pred_region
      %73 = dma.done [#allocation9], 1024
    $region37: #{tpu_custom_call.1} parent=1 // pred_fallthru
      _
    %v74 = vld [vmem:[#allocation2] sm:$0xff]
    %v75 = vld [vmem:[%s4] sm:$0xff]
    %v76 = vld [vmem:[#allocation5] sm:$0xff]
    %v77 = vld [vmem:[#allocation5 + $0x8] sm:$0xff]
    %v78 = vlaneseq
    %v79 = vshrl.u32 %v78, 7
    %v80 = vsub.s32 0, %v79
    %v81 = vrot.slane %v75, %v80
    %vm82 = vcmask 130048
    %v84 = vsel %vm82, %v74, 0
    %86 = vmatprep.subr.mxu0 0.0
    %87 = vmatpush1.msra.mxu0 %v76
    %88 = vmatprep.subr.mxu0 0.0
    %89 = vmatpush1.msra.mxu0 %v77
    %90 = vmatprep.subr.mxu0 0.0
    %91 = vmatpush1.msra.mxu0 0.0
    %92 = vmatprep.subr.mxu0 0.0
    %93 = vmatpush1.msra.mxu0 0.0
    %94 = vmatprep.subr.mxu0 0.0
    %95 = vmatpush1.msra.mxu0 0.0
    %96 = vmatprep.subr.mxu0 0.0
    %97 = vmatpush1.msra.mxu0 0.0
    %98 = vmatprep.subr.mxu0 0.0
    %99 = vmatpush1.msra.mxu0 0.0
    %100 = vmatprep.subr.mxu0 0.0
    %101 = vmatpush1.msra.mxu0 0.0
    %102 = vmatprep.subr.mxu0 0.0
    %103 = vmatpush1.msra.mxu0 0.0
    %104 = vmatprep.subr.mxu0 0.0
    %105 = vmatpush1.msra.mxu0 0.0
    %106 = vmatprep.subr.mxu0 0.0
    %107 = vmatpush1.msra.mxu0 0.0
    %108 = vmatprep.subr.mxu0 0.0
    %109 = vmatpush1.msra.mxu0 0.0
    %110 = vmatprep.subr.mxu0 0.0
    %111 = vmatpush1.msra.mxu0 0.0
    %112 = vmatprep.subr.mxu0 0.0
    %113 = vmatpush1.msra.mxu0 0.0
    %114 = vmatprep.subr.mxu0 0.0
    %115 = vmatpush1.msra.mxu0 0.0
    %116 = vmatprep.subr.mxu0 0.0
    %117 = vmatpush1.msra.mxu0 0.0
    %118 = vmatprep.subr.mxu0 0.0
    %119 = vmatpush1.msra.mxu0 0.0
    %120 = vmatprep.subr.mxu0 0.0
    %121 = vmatpush1.msra.mxu0 0.0
    %122 = vmatprep.subr.mxu0 0.0
    %123 = vmatpush1.msra.mxu0 0.0
    %124 = vmatprep.subr.mxu0 0.0
    %125 = vmatpush1.msra.mxu0 0.0
    %126 = vmatprep.subr.mxu0 0.0
    %127 = vmatpush1.msra.mxu0 0.0
    %128 = vmatprep.subr.mxu0 0.0
    %129 = vmatpush1.msra.mxu0 0.0
    %130 = vmatprep.subr.mxu0 0.0
    %131 = vmatpush1.msra.mxu0 0.0
    %132 = vmatprep.subr.mxu0 0.0
    %133 = vmatpush1.msra.mxu0 0.0
    %134 = vmatprep.subr.mxu0 0.0
    %135 = vmatpush1.msra.mxu0 0.0
    %136 = vmatprep.subr.mxu0 0.0
    %137 = vmatpush1.msra.mxu0 0.0
    %138 = vmatprep.subr.mxu0 0.0
    %139 = vmatpush1.msra.mxu0 0.0
    %140 = vmatprep.subr.mxu0 0.0
    %141 = vmatpush1.msra.mxu0 0.0
    %142 = vmatprep.subr.mxu0 0.0
    %143 = vmatpush1.msra.mxu0 0.0
    %144 = vmatprep.subr.mxu0 0.0
    %145 = vmatpush1.msra.mxu0 0.0
    %146 = vmatprep.subr.mxu0 0.0
    %147 = vmatpush1.msra.mxu0 0.0
    %148 = vmatprep.subr.mxu0 0.0
    %149 = vmatpush1.msra.mxu0 0.0
    %150 = vmatprep.mubr.f32.mxu0 0.0
    %151 = vmatmul.mubr.f32.gmra.mrb[0].mxu0 %v84
    %v152 = vpop.f32.mrb[0].mxu0
    %v153 = vadd.f32 %v81, %v152
    %v154 = vpop.f32.mrb[0].mxu0
    %155 = vdwg.mxu0
    %v156 = vmax.f32 %v153, 0.0
    %vm157 = vcmask 523264
    %v158 = vsel %vm157, %v156, 0.0
    %v159 = vrot.slane %v158, 4
    %v160 = vadd.f32 %v158, %v159
    %v161 = vrot.slane %v160, 2
    %v162 = vadd.f32 %v160, %v161
    %v163 = vrot.slane %v162, 1
    %v164 = vadd.f32 %v162, %v163
    %v165 = vrcp.pop 8.0
    %v166 = vmul.f32 %v164, %v165
    %v167 = vmul.f32 %v156, %v156
    %v168 = vsel %vm157, %v167, 0.0
    %v169 = vrot.slane %v168, 4
    %v170 = vadd.f32 %v168, %v169
    %v171 = vrot.slane %v170, 2
    %v172 = vadd.f32 %v170, %v171
    %v173 = vrot.slane %v172, 1
    %v174 = vadd.f32 %v172, %v173
    %v175 = vmul.f32 %v174, %v165
    %v176 = vmul.f32 %v166, %v166
    %v177 = vsub.f32 %v175, %v176
    %v178 = vadd.f32 %v177, 1e-05
    %v179 = vrsqrt.pop %v178
    %v180 = vmul.f32 %v75, %v179
    %v181 = vmul.f32 %v166, %v180
    %v183 = vrot.slane %v181, 7
    %v185 = vsub.f32 %v75, %v183
    %v186 = vlaneseq
    %v187 = vshrl.u32 %v186, 7
    %v188 = vsub.s32 1, %v187
    %v189 = vrot.slane %v180, %v188
    %v190 = vmul.f32 %v156, %v189
    %v191 = vlaneseq
    %v192 = vshrl.u32 %v191, 7
    %v193 = vsub.s32 2, %v192
    %v194 = vrot.slane %v185, %v193
    %v195 = vadd.f32 %v190, %v194
    %v196 = vld [vmem:[#allocation7] sm:$0xff]
    %v197 = vld [vmem:[#allocation7 + $0x8] sm:$0xff]
    %v198 = vld [vmem:[#allocation7 + $0x10] sm:$0xff]
    %v199 = vld [vmem:[#allocation7 + $0x18] sm:$0xff]
    %v200 = vld [vmem:[#allocation7 + $0x20] sm:$0xff]
    %v201 = vld [vmem:[#allocation7 + $0x28] sm:$0xff]
    %v202 = vld [vmem:[#allocation7 + $0x30] sm:$0xff]
    %v203 = vld [vmem:[#allocation7 + $0x38] sm:$0xff]
    %v204 = vlaneseq
    %v205 = vshrl.u32 %v204, 7
    %v206 = vsub.s32 3, %v205
    %v207 = vrot.slane %v75, %v206
    %v209 = vsel %vm157, %v195, 0
    %211 = vmatprep.subr.mxu0 0.0
    %212 = vmatpush1.msra.mxu0 %v196
    %213 = vmatprep.subr.mxu0 0.0
    %214 = vmatpush1.msra.mxu0 %v197
    %215 = vmatprep.subr.mxu0 0.0
    %216 = vmatpush1.msra.mxu0 %v198
    %217 = vmatprep.subr.mxu0 0.0
    %218 = vmatpush1.msra.mxu0 %v199
    %219 = vmatprep.subr.mxu0 0.0
    %220 = vmatpush1.msra.mxu0 %v200
    %221 = vmatprep.subr.mxu0 0.0
    %222 = vmatpush1.msra.mxu0 %v201
    %223 = vmatprep.subr.mxu0 0.0
    %224 = vmatpush1.msra.mxu0 %v202
    %225 = vmatprep.subr.mxu0 0.0
    %226 = vmatpush1.msra.mxu0 %v203
    %227 = vmatprep.subr.mxu0 0.0
    %228 = vmatpush1.msra.mxu0 0.0
    %229 = vmatprep.subr.mxu0 0.0
    %230 = vmatpush1.msra.mxu0 0.0
    %231 = vmatprep.subr.mxu0 0.0
    %232 = vmatpush1.msra.mxu0 0.0
    %233 = vmatprep.subr.mxu0 0.0
    %234 = vmatpush1.msra.mxu0 0.0
    %235 = vmatprep.subr.mxu0 0.0
    %236 = vmatpush1.msra.mxu0 0.0
    %237 = vmatprep.subr.mxu0 0.0
    %238 = vmatpush1.msra.mxu0 0.0
    %239 = vmatprep.subr.mxu0 0.0
    %240 = vmatpush1.msra.mxu0 0.0
    %241 = vmatprep.subr.mxu0 0.0
    %242 = vmatpush1.msra.mxu0 0.0
    %243 = vmatprep.subr.mxu0 0.0
    %244 = vmatpush1.msra.mxu0 0.0
    %245 = vmatprep.subr.mxu0 0.0
    %246 = vmatpush1.msra.mxu0 0.0
    %247 = vmatprep.subr.mxu0 0.0
    %248 = vmatpush1.msra.mxu0 0.0
    %249 = vmatprep.subr.mxu0 0.0
    %250 = vmatpush1.msra.mxu0 0.0
    %251 = vmatprep.subr.mxu0 0.0
    %252 = vmatpush1.msra.mxu0 0.0
    %253 = vmatprep.subr.mxu0 0.0
    %254 = vmatpush1.msra.mxu0 0.0
    %255 = vmatprep.subr.mxu0 0.0
    %256 = vmatpush1.msra.mxu0 0.0
    %257 = vmatprep.subr.mxu0 0.0
    %258 = vmatpush1.msra.mxu0 0.0
    %259 = vmatprep.subr.mxu0 0.0
    %260 = vmatpush1.msra.mxu0 0.0
    %261 = vmatprep.subr.mxu0 0.0
    %262 = vmatpush1.msra.mxu0 0.0
    %263 = vmatprep.subr.mxu0 0.0
    %264 = vmatpush1.msra.mxu0 0.0
    %265 = vmatprep.subr.mxu0 0.0
    %266 = vmatpush1.msra.mxu0 0.0
    %267 = vmatprep.subr.mxu0 0.0
    %268 = vmatpush1.msra.mxu0 0.0
    %269 = vmatprep.subr.mxu0 0.0
    %270 = vmatpush1.msra.mxu0 0.0
    %271 = vmatprep.subr.mxu0 0.0
    %272 = vmatpush1.msra.mxu0 0.0
    %273 = vmatprep.subr.mxu0 0.0
    %274 = vmatpush1.msra.mxu0 0.0
    %275 = vmatprep.mubr.f32.mxu0 0.0
    %276 = vmatmul.mubr.f32.gmra.mrb[0].mxu0 %v209
    %v277 = vpop.f32.mrb[0].mxu0
    %v278 = vadd.f32 %v207, %v277
    %v279 = vpop.f32.mrb[0].mxu0
    %280 = vdwg.mxu0
    %v281 = vmax.f32 %v278, 0.0
    %v282 = vsel %vm157, %v281, 0.0
    %v283 = vrot.slane %v282, 4
    %v284 = vadd.f32 %v282, %v283
    %v285 = vrot.slane %v284, 2
    %v286 = vadd.f32 %v284, %v285
    %v287 = vrot.slane %v286, 1
    %v288 = vadd.f32 %v286, %v287
    %v289 = vmul.f32 %v288, %v165
    %v290 = vmul.f32 %v281, %v281
    %v291 = vsel %vm157, %v290, 0.0
    %v292 = vrot.slane %v291, 4
    %v293 = vadd.f32 %v291, %v292
    %v294 = vrot.slane %v293, 2
    %v295 = vadd.f32 %v293, %v294
    %v296 = vrot.slane %v295, 1
    %v297 = vadd.f32 %v295, %v296
    %v298 = vmul.f32 %v297, %v165
    %v299 = vmul.f32 %v289, %v289
    %v300 = vsub.f32 %v298, %v299
    %v301 = vadd.f32 %v300, 1e-05
    %v302 = vrsqrt.pop %v301
    %v303 = vmul.f32 %v75, %v302
    %v304 = vmul.f32 %v289, %v303
    %v306 = vrot.slane %v304, 7
    %v308 = vsub.f32 %v75, %v306
    %v309 = vlaneseq
    %v310 = vshrl.u32 %v309, 7
    %v311 = vsub.s32 4, %v310
    %v312 = vrot.slane %v303, %v311
    %v313 = vmul.f32 %v281, %v312
    %v314 = vlaneseq
    %v315 = vshrl.u32 %v314, 7
    %v316 = vsub.s32 5, %v315
    %v317 = vrot.slane %v308, %v316
    %v318 = vadd.f32 %v313, %v317
    %v319 = vld [vmem:[#allocation8] sm:$0xff]
    %v320 = vld [vmem:[#allocation8 + $0x8] sm:$0xff]
    %v321 = vld [vmem:[#allocation8 + $0x10] sm:$0xff]
    %v322 = vld [vmem:[#allocation8 + $0x18] sm:$0xff]
    %v323 = vld [vmem:[#allocation8 + $0x20] sm:$0xff]
    %v324 = vld [vmem:[#allocation8 + $0x28] sm:$0xff]
    %v325 = vld [vmem:[#allocation8 + $0x30] sm:$0xff]
    %v326 = vld [vmem:[#allocation8 + $0x38] sm:$0xff]
    %v327 = vlaneseq
    %v328 = vshrl.u32 %v327, 7
    %v329 = vsub.s32 6, %v328
    %v330 = vrot.slane %v75, %v329
    %v332 = vsel %vm157, %v318, 0
    %334 = vmatprep.subr.mxu0 0.0
    %335 = vmatpush1.msra.mxu0 %v319
    %336 = vmatprep.subr.mxu0 0.0
    %337 = vmatpush1.msra.mxu0 %v320
    %338 = vmatprep.subr.mxu0 0.0
    %339 = vmatpush1.msra.mxu0 %v321
    %340 = vmatprep.subr.mxu0 0.0
    %341 = vmatpush1.msra.mxu0 %v322
    %342 = vmatprep.subr.mxu0 0.0
    %343 = vmatpush1.msra.mxu0 %v323
    %344 = vmatprep.subr.mxu0 0.0
    %345 = vmatpush1.msra.mxu0 %v324
    %346 = vmatprep.subr.mxu0 0.0
    %347 = vmatpush1.msra.mxu0 %v325
    %348 = vmatprep.subr.mxu0 0.0
    %349 = vmatpush1.msra.mxu0 %v326
    %350 = vmatprep.subr.mxu0 0.0
    %351 = vmatpush1.msra.mxu0 0.0
    %352 = vmatprep.subr.mxu0 0.0
    %353 = vmatpush1.msra.mxu0 0.0
    %354 = vmatprep.subr.mxu0 0.0
    %355 = vmatpush1.msra.mxu0 0.0
    %356 = vmatprep.subr.mxu0 0.0
    %357 = vmatpush1.msra.mxu0 0.0
    %358 = vmatprep.subr.mxu0 0.0
    %359 = vmatpush1.msra.mxu0 0.0
    %360 = vmatprep.subr.mxu0 0.0
    %361 = vmatpush1.msra.mxu0 0.0
    %362 = vmatprep.subr.mxu0 0.0
    %363 = vmatpush1.msra.mxu0 0.0
    %364 = vmatprep.subr.mxu0 0.0
    %365 = vmatpush1.msra.mxu0 0.0
    %366 = vmatprep.subr.mxu0 0.0
    %367 = vmatpush1.msra.mxu0 0.0
    %368 = vmatprep.subr.mxu0 0.0
    %369 = vmatpush1.msra.mxu0 0.0
    %370 = vmatprep.subr.mxu0 0.0
    %371 = vmatpush1.msra.mxu0 0.0
    %372 = vmatprep.subr.mxu0 0.0
    %373 = vmatpush1.msra.mxu0 0.0
    %374 = vmatprep.subr.mxu0 0.0
    %375 = vmatpush1.msra.mxu0 0.0
    %376 = vmatprep.subr.mxu0 0.0
    %377 = vmatpush1.msra.mxu0 0.0
    %378 = vmatprep.subr.mxu0 0.0
    %379 = vmatpush1.msra.mxu0 0.0
    %380 = vmatprep.subr.mxu0 0.0
    %381 = vmatpush1.msra.mxu0 0.0
    %382 = vmatprep.subr.mxu0 0.0
    %383 = vmatpush1.msra.mxu0 0.0
    %384 = vmatprep.subr.mxu0 0.0
    %385 = vmatpush1.msra.mxu0 0.0
    %386 = vmatprep.subr.mxu0 0.0
    %387 = vmatpush1.msra.mxu0 0.0
    %388 = vmatprep.subr.mxu0 0.0
    %389 = vmatpush1.msra.mxu0 0.0
    %390 = vmatprep.subr.mxu0 0.0
    %391 = vmatpush1.msra.mxu0 0.0
    %392 = vmatprep.subr.mxu0 0.0
    %393 = vmatpush1.msra.mxu0 0.0
    %394 = vmatprep.subr.mxu0 0.0
    %395 = vmatpush1.msra.mxu0 0.0
    %396 = vmatprep.subr.mxu0 0.0
    %397 = vmatpush1.msra.mxu0 0.0
    %398 = vmatprep.mubr.f32.mxu0 0.0
    %399 = vmatmul.mubr.f32.gmra.mrb[0].mxu0 %v332
    %v400 = vpop.f32.mrb[0].mxu0
    %v401 = vadd.f32 %v330, %v400
    %v402 = vpop.f32.mrb[0].mxu0
    %403 = vdwg.mxu0
    %404 = vst [vmem:[#allocation10] sm:$0xff] %v401
    // Predicated region
    $region38: #{tpu_custom_call.1} parent=1 // pred_check
      _
    $region39: #{tpu_custom_call.1} parent=1 // pred_check_branch
      %406 = sbr.rel (0) target = $region41
    $region40: #{tpu_custom_call.1} parent=1 // pred_region
      %s408 = ssub.s32 128, 128
      %409 = vsyncadd [#allocation4], %s408
      %s411 = sshll.u32 [#allocation10], 4
      %s412 = int_to_ptr.vmem [resolvable:$true] %s411
      %414 = dma.vmem_to_hbm [thread:$0]  %s412, 128, %s5, [#allocation4]
    $region41: #{tpu_custom_call.1} parent=1 // pred_fallthru
      _
    // Predicated region
    $region42: #{tpu_custom_call.1} parent=1 // pred_check
      _
    $region43: #{tpu_custom_call.1} parent=1 // pred_check_branch
      %416 = sbr.rel (0) target = $region45
    $region44: #{tpu_custom_call.1} parent=1 // pred_region
      %417 = dma.done [#allocation4], 128
    $region45: #{tpu_custom_call.1} parent=1 // pred_fallthru
      _
    %418 = vsyncpa [#allocation3], 1
    %419 = vsyncpa [#allocation6], 1
    %420 = vsyncpa [#allocation9], 1
    %421 = vsyncpa [#allocation4], 1

</llo_original>
